<compile_context>
chip_gen: v6e
topology: v6e:2x2x1
jax: 0.10.0
libtpu: 0.0.40
codegen_flags: <defaults>
</compile_context>

<pallas_src>
import functools

import numpy as np
import jax
import jax.numpy as jnp
from jax import lax
from jax.experimental import pallas as pl
from jax.experimental.pallas import tpu as pltpu


# ----------------------------- FCOS config ---------------------------------
STRIDES = [8, 16, 32, 64, 128]
MI = [[-1, 64], [64, 128], [128, 256], [256, 512], [512, 100000000]]
ALPHA = 0.25
GAMMA = 2.0
CLS_LOSS_WEIGHT = 1.0
BOX_LOSS_WEIGHT = 1.0
CENTER_NESS_LOSS_WEIGHT = 1.0
CENTER_SAMPLE_RADIUS = 1.5


# ------------------------- positions (FCOSPositions) -----------------------
def fcos_positions(feature_sizes, strides):
    # feature_sizes: list of [W, H]; returns list of [H, W, 2] with (x, y)
    out = []
    for (w, h), s in zip(feature_sizes, strides):
        sx = (np.arange(w, dtype=np.float32) + 0.5) * s
        sy = (np.arange(h, dtype=np.float32) + 0.5) * s
        xs, ys = np.meshgrid(sx, sy)            # [h, w] each
        out.append(np.stack([xs, ys], axis=-1).astype(np.float32))
    return out


# ----------------------- target assignment (plain JAX) ---------------------
def assign_targets_one_image(positions, mi, stride, annots):
    """positions [P,2], mi [P,2], stride [P,1], annots [A,5] -> targets [P,8]."""
    P = positions.shape[0]
    A = annots.shape[0]
    valid = (annots[:, 4] >= 0).astype(jnp.float32)            # [A]
    gt_boxes = annots[:, 0:4]                                  # [A,4]

    pos = positions[:, None, :]                                # [P,1,2]
    boxes = gt_boxes[None, :, :]                               # [1,A,4]

    cand_center = (boxes[:, :, 2:4] + boxes[:, :, 0:2]) / 2.0  # [1,A,2]
    judge_dist = stride * CENTER_SAMPLE_RADIUS                 # [P,1]

    lt = pos - boxes[:, :, 0:2]                                # [P,A,2]
    rb = boxes[:, :, 2:4] - pos                                # [P,A,2]
    cand = jnp.concatenate([lt, rb], axis=-1)                  # [P,A,4]

    sample_flag = (cand.min(axis=-1, keepdims=True) > 0).astype(jnp.float32)
    cand = cand * sample_flag

    dist = jnp.sqrt((pos[:, :, 0] - cand_center[:, :, 0]) ** 2 +
                    (pos[:, :, 1] - cand_center[:, :, 1]) ** 2)         # [P,A]
    center_flag = (dist < judge_dist).astype(jnp.float32)[..., None]
    cand = cand * center_flag

    cand_max = cand.max(axis=-1, keepdims=True)                          # [P,A,1]
    m1 = (cand_max[:, :, 0] > mi[:, 0:1]).astype(jnp.float32)[..., None]
    m2 = (cand_max[:, :, 0] < mi[:, 1:2]).astype(jnp.float32)[..., None]
    cand = cand * m1 * m2
    cand = cand * valid[None, :, None]                                   # drop padded annots

    cand_val = cand.sum(axis=-1)                                         # [P,A]
    final_flag = (cand_val.sum(axis=-1) > 0).astype(jnp.float32)         # [P]

    gts_wh = gt_boxes[:, 2:4] - gt_boxes[:, 0:2]
    gts_area = gts_wh[:, 0] * gts_wh[:, 1]                               # [A]
    gts_area = jnp.where(cand_val == 0.0, 1e8, gts_area[None, :])        # [P,A]
    min_idx = jnp.argmin(gts_area, axis=1)                               # [P]

    reg_gts = jnp.take_along_axis(cand, min_idx[:, None, None], axis=1)[:, 0, :]   # [P,4]
    cls_gts = jnp.take_along_axis(jnp.broadcast_to(annots[None, :, 4], (P, A)),
                                  min_idx[:, None], axis=1)[:, 0]                   # [P]

    ff = final_flag[:, None]
    reg_t = reg_gts * ff
    cls_t = (cls_gts[:, None] + 1.0) * ff
    l, t, r, b = reg_t[:, 0:1], reg_t[:, 1:2], reg_t[:, 2:3], reg_t[:, 3:4]
    d_lr = jnp.where(ff > 0, jnp.maximum(l, r), 1.0)
    d_tb = jnp.where(ff > 0, jnp.maximum(t, b), 1.0)
    ctr_t = jnp.sqrt((jnp.minimum(l, r) / d_lr) * (jnp.minimum(t, b) / d_tb)) * ff
    return jnp.concatenate([reg_t, cls_t, ctr_t, positions], axis=1)     # [P,8]


# ------------------------------ Pallas kernel ------------------------------
# Inputs (all channel-major, sublane+lane dense, point p = s*L + l):
#   cls_ref : (C, 8, TL)  per-class probabilities
#   reg_ref : (4, 8, TL)  reg predictions (l, t, r, b)
#   ctr_ref : (1, 8, TL)  center-ness prediction
#   tgt_ref : (8, 8, TL)  targets (reg 0..3, label 4, ctr 5, x 6, y 7)
# acc_ref  : (32, TL)     fused accumulator [cls | box | ctr | pos] x 8 sublanes
def _fcos_loss_kernel(cls_ref, reg_ref, ctr_ref, tgt_ref, out_ref, acc_ref,
                      *, num_classes, n_valid, lanes_total,
                      alpha, gamma, cls_w, box_w, ctr_w):
    i = pl.program_id(0)
    C = num_classes
    TL = cls_ref.shape[2]
    eps = 1e-4

    @pl.when(i == 0)
    def _():
        acc_ref[...] = jnp.zeros_like(acc_ref)

    cls_p = jnp.clip(cls_ref[...], eps, 1.0 - eps)          # (C, 8, TL)
    reg_p = reg_ref[...]                                    # (4, 8, TL)
    ctr_p = jnp.clip(ctr_ref[0], eps, 1.0 - eps)            # (8, TL)
    tgt = tgt_ref[...]                                      # (8, 8, TL)

    # valid-point mask computed in-kernel (no mask DMA); p = s*lanes_total + lane
    sub = lax.broadcasted_iota(jnp.int32, (8, TL), 0)
    lane = lax.broadcasted_iota(jnp.int32, (8, TL), 1)
    gidx = sub * lanes_total + i * TL + lane
    msk = (gidx < n_valid).astype(jnp.float32)              # (8, TL)

    label = tgt[4]                                          # (8, TL)
    pos = (label > 0.0).astype(jnp.float32) * msk           # (8, TL)

    # ---------------- focal (cls) loss: all valid points --------------------
    class_id = lax.broadcasted_iota(jnp.int32, (C, 8, TL), 0) + 1
    gt_onehot = (label.astype(jnp.int32)[None, :, :] == class_id)       # bool
    alpha_factor = jnp.where(gt_onehot, alpha, 1.0 - alpha)
    pt = jnp.where(gt_onehot, cls_p, 1.0 - cls_p)
    one_minus_pt = 1.0 - pt
    if float(gamma) == 2.0:
        mod = one_minus_pt * one_minus_pt
    else:
        mod = jnp.power(one_minus_pt, gamma)
    # one-hot targets => BCE collapses to a single log: bce = -log(pt)
    focal = alpha_factor * mod * (-jnp.log(pt))                         # (C, 8, TL)
    focal_pp = jnp.sum(focal, axis=0) * msk                             # (8, TL)

    # ---------------- GIoU (reg) loss: positives only ------------------------
    reg_e = jnp.exp(reg_p)                                              # (4, 8, TL)
    x = tgt[6]
    y = tgt[7]
    ctr_t = tgt[5]
    p_xmin = x - reg_e[0]
    p_ymin = y - reg_e[1]
    p_xmax = x + reg_e[2]
    p_ymax = y + reg_e[3]
    g_xmin = x - tgt[0]
    g_ymin = y - tgt[1]
    g_xmax = x + tgt[2]
    g_ymax = y + tgt[3]

    ov_w = jnp.maximum(jnp.minimum(p_xmax, g_xmax) - jnp.maximum(p_xmin, g_xmin), 0.0)
    ov_h = jnp.maximum(jnp.minimum(p_ymax, g_ymax) - jnp.maximum(p_ymin, g_ymin), 0.0)
    ov_area = ov_w * ov_h
    p_area = jnp.maximum(p_xmax - p_xmin, 0.0) * jnp.maximum(p_ymax - p_ymin, 0.0)
    g_area = jnp.maximum(g_xmax - g_xmin, 0.0) * jnp.maximum(g_ymax - g_ymin, 0.0)
    union = jnp.maximum(p_area + g_area - ov_area, eps)
    ious = ov_area / union
    en_w = jnp.maximum(jnp.maximum(p_xmax, g_xmax) - jnp.minimum(p_xmin, g_xmin), 0.0)
    en_h = jnp.maximum(jnp.maximum(p_ymax, g_ymax) - jnp.minimum(p_ymin, g_ymin), 0.0)
    en_area = jnp.maximum(en_w * en_h, eps)
    gious = ious - (en_area - union) / en_area
    iou_pp = (1.0 - gious) * ctr_t * pos                                # (8, TL)

    # ---------------- center-ness loss: positives only -----------------------
    ctr_pp = -(ctr_t * jnp.log(ctr_p) + (1.0 - ctr_t) * jnp.log(1.0 - ctr_p)) * pos

    # fused lane/sublane-wide vector accumulation; single RMW stream
    acc_ref[...] += jnp.concatenate([focal_pp, iou_pp, ctr_pp, pos], axis=0)

    @pl.when(i == pl.num_programs(0) - 1)
    def _():
        acc = acc_ref[...]
        s_cls = jnp.sum(acc[0:8, :])
        s_box = jnp.sum(acc[8:16, :])
        s_ctr = jnp.sum(acc[16:24, :])
        n_pos = jnp.sum(acc[24:32, :])
        inv = 1.0 / jnp.maximum(n_pos, 1.0)
        has = (n_pos > 0.0).astype(jnp.float32)
        out_ref[0] = cls_w * s_cls * inv * has
        out_ref[1] = box_w * s_box * inv * has
        out_ref[2] = ctr_w * s_ctr * inv * has


def fcos_loss_pallas(cls_preds, reg_preds, center_preds, batch_targets,
                     *, alpha=ALPHA, gamma=GAMMA, cls_w=CLS_LOSS_WEIGHT,
                     box_w=BOX_LOSS_WEIGHT, ctr_w=CENTER_NESS_LOSS_WEIGHT,
                     tile=16384):
    """Flattened inputs: cls [N,C], reg [N,4], ctr [N,1], targets [N,8]."""
    N, C = cls_preds.shape
    assert tile % 1024 == 0
    if N <= tile:                                  # don't over-tile tiny inputs
        tile = max(1024, ((N + 1023) // 1024) * 1024)
    n_pad = ((N + tile - 1) // tile) * tile
    L = n_pad // 8                                 # lanes per sublane row (whole array)
    TL = tile // 8                                 # lanes per tile

    f32 = jnp.float32

    def dense(x):
        # [N, k] point-major -> (k, 8, L) channel-major, sublane+lane dense.
        # One transpose+pad+reshape per input; no concatenate, no filler rows.
        k = x.shape[1]
        xt = jnp.transpose(x).astype(f32)          # (k, N)
        if n_pad > N:
            xt = jnp.pad(xt, ((0, 0), (0, n_pad - N)))
        return xt.reshape(k, 8, L)

    cls_d = dense(cls_preds)                       # (C, 8, L)
    reg_d = dense(reg_preds)                       # (4, 8, L)
    ctr_d = dense(center_preds)                    # (1, 8, L)
    tgt_d = dense(batch_targets)                   # (8, 8, L)

    kernel = functools.partial(
        _fcos_loss_kernel, num_classes=C, n_valid=N, lanes_total=L,
        alpha=alpha, gamma=gamma, cls_w=cls_w, box_w=box_w, ctr_w=ctr_w)

    # Double-buffered input blocks + fused accumulator + slack; keep within
    # v5e's 16 MiB default scoped VMEM and v7x's 64 MiB physical VMEM.
    block_bytes = (C + 13) * tile * 4
    vmem_need = 2 * block_bytes + 32 * TL * 4 + (2 << 20)
    vmem_limit = int(min(max(vmem_need, 16 << 20), 64 << 20))

    out = pl.pallas_call(
        kernel,
        out_shape=jax.ShapeDtypeStruct((3,), jnp.float32),
        grid_spec=pltpu.PrefetchScalarGridSpec(
            num_scalar_prefetch=0,
            grid=(n_pad // tile,),
            in_specs=[
                pl.BlockSpec((C, 8, TL), lambda i: (0, 0, i)),
                pl.BlockSpec((4, 8, TL), lambda i: (0, 0, i)),
                pl.BlockSpec((1, 8, TL), lambda i: (0, 0, i)),
                pl.BlockSpec((8, 8, TL), lambda i: (0, 0, i)),
            ],
            out_specs=pl.BlockSpec(memory_space=pltpu.MemorySpace.SMEM),
            scratch_shapes=[pltpu.VMEM((32, TL), jnp.float32)],
        ),
        compiler_params=pltpu.CompilerParams(
            dimension_semantics=("arbitrary",),
            vmem_limit_bytes=vmem_limit),
    )(cls_d, reg_d, ctr_d, tgt_d)

    return {"cls_loss": out[0], "reg_loss": out[1], "center_ness_loss": out[2]}


# --------------------------- pure-JAX reference ----------------------------
def reference_losses(cls_preds, reg_preds, center_preds, targets,
                     alpha=ALPHA, gamma=GAMMA):
    cls_p = jnp.clip(cls_preds, 1e-4, 1.0 - 1e-4)
    ctr_p = jnp.clip(center_preds, 1e-4, 1.0 - 1e-4)
    label = targets[:, 4:5]
    pos = (label > 0.0).astype(jnp.float32)
    n_pos = jnp.sum(pos)
    safe = jnp.maximum(n_pos, 1.0)
    has = (n_pos > 0.0).astype(jnp.float32)

    C = cls_p.shape[1]
    class_id = (jnp.arange(C, dtype=jnp.float32) + 1.0)[None, :]
    gt = (label == class_id).astype(jnp.float32)
    af = jnp.where(gt == 1.0, alpha, 1.0 - alpha)
    pt = jnp.where(gt == 1.0, cls_p, 1.0 - cls_p)
    fw = af * (1.0 - pt) ** gamma
    bce = -(gt * jnp.log(cls_p) + (1.0 - gt) * jnp.log(1.0 - cls_p))
    cls_loss = jnp.sum(fw * bce) / safe * has

    reg_e = jnp.exp(reg_preds)
    xy = targets[:, 6:8]
    ctr_t = targets[:, 5:6]
    pred_min = xy - reg_e[:, 0:2]
    pred_max = xy + reg_e[:, 2:4]
    gt_min = xy - targets[:, 0:2]
    gt_max = xy + targets[:, 2:4]
    ov_wh = jnp.maximum(jnp.minimum(pred_max, gt_max) - jnp.maximum(pred_min, gt_min), 0.0)
    ov_area = ov_wh[:, 0:1] * ov_wh[:, 1:2]
    p_wh = jnp.maximum(pred_max - pred_min, 0.0)
    g_wh = jnp.maximum(gt_max - gt_min, 0.0)
    union = jnp.maximum(p_wh[:, 0:1] * p_wh[:, 1:2] + g_wh[:, 0:1] * g_wh[:, 1:2] - ov_area, 1e-4)
    ious = ov_area / union
    en_wh = jnp.maximum(jnp.maximum(pred_max, gt_max) - jnp.minimum(pred_min, gt_min), 0.0)
    en_area = jnp.maximum(en_wh[:, 0:1] * en_wh[:, 1:2], 1e-4)
    gious = ious - (en_area - union) / en_area
    reg_loss = jnp.sum((1.0 - gious) * ctr_t * pos) / safe * has

    c_loss = -(ctr_t * jnp.log(ctr_p) + (1.0 - ctr_t) * jnp.log(1.0 - ctr_p)) * pos
    ctr_loss = jnp.sum(c_loss) / safe * has

    return {"cls_loss": CLS_LOSS_WEIGHT * cls_loss,
            "reg_loss": BOX_LOSS_WEIGHT * reg_loss,
            "center_ness_loss": CENTER_NESS_LOSS_WEIGHT * ctr_loss}


# ---------------------------------- main ------------------------------------
if __name__ == "__main__":
    key = jax.random.PRNGKey(0)
    B = 2
    num_classes = 4
    fmap_hw = [(16, 16), (8, 8), (4, 4), (2, 2), (1, 1)]   # (H, W) per level

    keys = jax.random.split(key, 3 * len(fmap_hw))
    cls_heads, reg_heads, ctr_heads = [], [], []
    ki = 0
    for (h, w) in fmap_hw:
        cls_heads.append(jax.random.uniform(keys[ki], (B, h, w, num_classes),
                                            jnp.float32, 0.01, 0.99)); ki += 1
        reg_heads.append(0.5 * jax.random.normal(keys[ki], (B, h, w, 4), jnp.float32)); ki += 1
        ctr_heads.append(jax.random.uniform(keys[ki], (B, h, w, 1),
                                            jnp.float32, 0.01, 0.99)); ki += 1

    # annotations: [B, max_annots, 5] with [x1, y1, x2, y2, class_id]; -1 pads
    annotations = jnp.array([
        [[12., 12., 80., 76., 1.],
         [40., 36., 120., 120., 2.],
         [-1., -1., -1., -1., -1.],
         [-1., -1., -1., -1., -1.]],
        [[4., 8., 60., 48., 0.],
         [70., 20., 126., 100., 3.],
         [-1., -1., -1., -1., -1.],
         [-1., -1., -1., -1., -1.]],
    ], dtype=jnp.float32)

    # per-point positions / mi / stride (glue, numpy)
    feature_sizes = [[w, h] for (h, w) in fmap_hw]
    positions_np = fcos_positions(feature_sizes, STRIDES)
    pos_list, mi_list, stride_list = [], [], []
    for p, mi_lv, s in zip(positions_np, MI, STRIDES):
        n = p.shape[0] * p.shape[1]
        pos_list.append(p.reshape(-1, 2))
        mi_list.append(np.tile(np.array(mi_lv, np.float32)[None, :], (n, 1)))
        stride_list.append(np.full((n, 1), s, np.float32))
    positions = jnp.asarray(np.concatenate(pos_list, 0))       # [P,2]
    mi_pts = jnp.asarray(np.concatenate(mi_list, 0))           # [P,2]
    stride_pts = jnp.asarray(np.concatenate(stride_list, 0))   # [P,1]

    def flat(heads):
        return jnp.concatenate([x.reshape(B, -1, x.shape[-1]) for x in heads], axis=1)

    cls_all = flat(cls_heads)       # [B, P, C]
    reg_all = flat(reg_heads)       # [B, P, 4]
    ctr_all = flat(ctr_heads)       # [B, P, 1]

    targets = jax.vmap(assign_targets_one_image,
                       in_axes=(None, None, None, 0))(positions, mi_pts,
                                                      stride_pts, annotations)  # [B,P,8]

    P = positions.shape[0]
    N = B * P
    cls_flat = cls_all.reshape(N, num_classes)
    reg_flat = reg_all.reshape(N, 4)
    ctr_flat = ctr_all.reshape(N, 1)
    tgt_flat = targets.reshape(N, 8)

    losses = fcos_loss_pallas(cls_flat, reg_flat, ctr_flat, tgt_flat)
    losses = jax.block_until_ready(losses)

    ref = reference_losses(cls_flat, reg_flat, ctr_flat, tgt_flat)
    for k in losses:
        assert np.allclose(np.asarray(losses[k]), np.asarray(ref[k]),
                           rtol=1e-3, atol=1e-4), (k, losses[k], ref[k])

    print("KERNEL_OK")
</pallas_src>

<mosaic_0001>
module attributes {stable_mosaic.version = 11 : i64} {
  func.func @_fcos_loss_kernel(%arg0: i32, %arg1: memref<4x8x128xf32, #tpu.memory_space<vmem>>, %arg2: memref<4x8x128xf32, #tpu.memory_space<vmem>>, %arg3: memref<1x8x128xf32, #tpu.memory_space<vmem>>, %arg4: memref<8x8x128xf32, #tpu.memory_space<vmem>>, %arg5: memref<3xf32, #tpu.memory_space<smem>>, %arg6: memref<32x128xf32, #tpu.memory_space<vmem>>) attributes {dimension_semantics = [#tpu.dimension_semantics<arbitrary>], iteration_bounds = array<i64: 1>, scalar_prefetch = 0 : i64, scratch_operands = 1 : i64, tpu.core_type = #tpu.core_type<tc>, window_params = [{transform_indices = @transform_0, window_bounds = array<i64: 4, 8, 128>}, {transform_indices = @transform_1, window_bounds = array<i64: 4, 8, 128>}, {transform_indices = @transform_2, window_bounds = array<i64: 1, 8, 128>}, {transform_indices = @transform_3, window_bounds = array<i64: 8, 8, 128>}, {transform_indices = @transform_4, window_bounds = array<i64: 3>}]} {
    %c0_i32 = arith.constant 0 : i32
    %0 = arith.cmpi eq, %arg0, %c0_i32 : i32
    %1 = arith.extui %0 : i1 to i32
    %c0_i32_0 = arith.constant 0 : i32
    %2 = arith.cmpi ne, %1, %c0_i32_0 : i32
    scf.if %2 {
      %cst_43 = arith.constant 0.000000e+00 : f32
      %158 = vector.broadcast %cst_43 : f32 to vector<32x128xf32>
      %c0_44 = arith.constant 0 : index
      %c0_45 = arith.constant 0 : index
      %159 = vector.load %arg6[%c0_44, %c0_45] : memref<32x128xf32, #tpu.memory_space<vmem>>, vector<32x128xf32>
      tpu.vector_store %arg6[%c0_44, %c0_45], %158 {strides = array<i32>} : memref<32x128xf32, #tpu.memory_space<vmem>>, vector<32x128xf32>,
    } else {
    }
    %c0 = arith.constant 0 : index
    %c0_1 = arith.constant 0 : index
    %c0_2 = arith.constant 0 : index
    %3 = vector.load %arg1[%c0, %c0_1, %c0_2] : memref<4x8x128xf32, #tpu.memory_space<vmem>>, vector<4x8x128xf32>
    %cst = arith.constant 9.99999974E-5 : f32
    %cst_3 = arith.constant 0.999899983 : f32
    %4 = vector.broadcast %cst : f32 to vector<4x8x128xf32>
    %5 = arith.maximumf %4, %3 : vector<4x8x128xf32>
    %6 = vector.broadcast %cst_3 : f32 to vector<4x8x128xf32>
    %7 = arith.minimumf %6, %5 : vector<4x8x128xf32>
    %c0_4 = arith.constant 0 : index
    %c0_5 = arith.constant 0 : index
    %c0_6 = arith.constant 0 : index
    %8 = vector.load %arg2[%c0_4, %c0_5, %c0_6] : memref<4x8x128xf32, #tpu.memory_space<vmem>>, vector<4x8x128xf32>
    %c0_7 = arith.constant 0 : index
    %c0_8 = arith.constant 0 : index
    %c0_9 = arith.constant 0 : index
    %9 = vector.load %arg3[%c0_7, %c0_8, %c0_9] : memref<1x8x128xf32, #tpu.memory_space<vmem>>, vector<1x8x128xf32>
    %10 = vector.shape_cast %9 : vector<1x8x128xf32> to vector<8x128xf32>
    %cst_10 = arith.constant 9.99999974E-5 : f32
    %cst_11 = arith.constant 0.999899983 : f32
    %11 = vector.broadcast %cst_10 : f32 to vector<8x128xf32>
    %12 = arith.maximumf %11, %10 : vector<8x128xf32>
    %13 = vector.broadcast %cst_11 : f32 to vector<8x128xf32>
    %14 = arith.minimumf %13, %12 : vector<8x128xf32>
    %c0_12 = arith.constant 0 : index
    %c0_13 = arith.constant 0 : index
    %c0_14 = arith.constant 0 : index
    %15 = vector.load %arg4[%c0_12, %c0_13, %c0_14] : memref<8x8x128xf32, #tpu.memory_space<vmem>>, vector<8x8x128xf32>
    %16 = tpu.iota {dimensions = array<i32: 0>} : vector<8x128xi32>
    %17 = tpu.iota {dimensions = array<i32: 1>} : vector<8x128xi32>
    %c128_i32 = arith.constant 128 : i32
    %18 = vector.broadcast %c128_i32 : i32 to vector<8x128xi32>
    %19 = arith.muli %16, %18 : vector<8x128xi32>
    %c128_i32_15 = arith.constant 128 : i32
    %20 = arith.muli %arg0, %c128_i32_15 : i32
    %21 = vector.broadcast %20 : i32 to vector<8x128xi32>
    %22 = arith.addi %19, %21 : vector<8x128xi32>
    %23 = arith.addi %22, %17 : vector<8x128xi32>
    %c682_i32 = arith.constant 682 : i32
    %24 = vector.broadcast %c682_i32 : i32 to vector<8x128xi32>
    %25 = arith.cmpi slt, %23, %24 : vector<8x128xi32>
    %26 = arith.extui %25 : vector<8x128xi1> to vector<8x128xi32>
    %27 = arith.sitofp %26 : vector<8x128xi32> to vector<8x128xf32>
    %28 = vector.extract_strided_slice %15 {offsets = [4, 0, 0], sizes = [1, 8, 128], strides = [1, 1, 1]} : vector<8x8x128xf32> to vector<1x8x128xf32>
    %29 = vector.shape_cast %28 : vector<1x8x128xf32> to vector<8x128xf32>
    %cst_16 = arith.constant 0.000000e+00 : f32
    %30 = vector.broadcast %cst_16 : f32 to vector<8x128xf32>
    %31 = arith.cmpf ogt, %29, %30 : vector<8x128xf32>
    %32 = arith.extui %31 : vector<8x128xi1> to vector<8x128xi32>
    %33 = arith.sitofp %32 : vector<8x128xi32> to vector<8x128xf32>
    %34 = arith.mulf %33, %27 : vector<8x128xf32>
    %35 = tpu.iota {dimensions = array<i32: 0>} : vector<4x8x128xi32>
    %c1_i32 = arith.constant 1 : i32
    %36 = vector.broadcast %c1_i32 : i32 to vector<4x8x128xi32>
    %37 = arith.addi %35, %36 : vector<4x8x128xi32>
    %38 = arith.fptosi %29 : vector<8x128xf32> to vector<8x128xi32>
    %39 = vector.shape_cast %38 : vector<8x128xi32> to vector<1x8x128xi32>
    %40 = vector.broadcast %39 : vector<1x8x128xi32> to vector<4x8x128xi32>
    %41 = arith.cmpi eq, %40, %37 : vector<4x8x128xi32>
    %cst_17 = arith.constant 2.500000e-01 : f32
    %cst_18 = arith.constant 7.500000e-01 : f32
    %42 = vector.broadcast %cst_17 : f32 to vector<4x8x128xf32>
    %43 = vector.broadcast %cst_18 : f32 to vector<4x8x128xf32>
    %44 = arith.select %41, %42, %43 : vector<4x8x128xi1>, vector<4x8x128xf32>
    %cst_19 = arith.constant 1.000000e+00 : f32
    %45 = vector.broadcast %cst_19 : f32 to vector<4x8x128xf32>
    %46 = arith.subf %45, %7 : vector<4x8x128xf32>
    %47 = arith.select %41, %7, %46 : vector<4x8x128xi1>, vector<4x8x128xf32>
    %cst_20 = arith.constant 1.000000e+00 : f32
    %48 = vector.broadcast %cst_20 : f32 to vector<4x8x128xf32>
    %49 = arith.subf %48, %47 : vector<4x8x128xf32>
    %50 = arith.mulf %49, %49 : vector<4x8x128xf32>
    %51 = arith.mulf %44, %50 : vector<4x8x128xf32>
    %52 = math.log %47 : vector<4x8x128xf32>
    %cst_21 = arith.constant 0.000000e+00 : f32
    %53 = vector.broadcast %cst_21 : f32 to vector<4x8x128xf32>
    %54 = arith.subf %53, %52 : vector<4x8x128xf32>
    %55 = arith.mulf %51, %54 : vector<4x8x128xf32>
    %cst_22 = arith.constant dense<0.000000e+00> : vector<8x128xf32>
    %56 = vector.multi_reduction <add>, %55, %cst_22 [0] : vector<4x8x128xf32> to vector<8x128xf32>
    %57 = arith.mulf %56, %27 : vector<8x128xf32>
    %58 = math.exp %8 : vector<4x8x128xf32>
    %59 = vector.extract_strided_slice %15 {offsets = [6, 0, 0], sizes = [1, 8, 128], strides = [1, 1, 1]} : vector<8x8x128xf32> to vector<1x8x128xf32>
    %60 = vector.shape_cast %59 : vector<1x8x128xf32> to vector<8x128xf32>
    %61 = vector.extract_strided_slice %15 {offsets = [7, 0, 0], sizes = [1, 8, 128], strides = [1, 1, 1]} : vector<8x8x128xf32> to vector<1x8x128xf32>
    %62 = vector.shape_cast %61 : vector<1x8x128xf32> to vector<8x128xf32>
    %63 = vector.extract_strided_slice %15 {offsets = [5, 0, 0], sizes = [1, 8, 128], strides = [1, 1, 1]} : vector<8x8x128xf32> to vector<1x8x128xf32>
    %64 = vector.shape_cast %63 : vector<1x8x128xf32> to vector<8x128xf32>
    %65 = vector.extract_strided_slice %58 {offsets = [0, 0, 0], sizes = [1, 8, 128], strides = [1, 1, 1]} : vector<4x8x128xf32> to vector<1x8x128xf32>
    %66 = vector.shape_cast %65 : vector<1x8x128xf32> to vector<8x128xf32>
    %67 = arith.subf %60, %66 : vector<8x128xf32>
    %68 = vector.extract_strided_slice %58 {offsets = [1, 0, 0], sizes = [1, 8, 128], strides = [1, 1, 1]} : vector<4x8x128xf32> to vector<1x8x128xf32>
    %69 = vector.shape_cast %68 : vector<1x8x128xf32> to vector<8x128xf32>
    %70 = arith.subf %62, %69 : vector<8x128xf32>
    %71 = vector.extract_strided_slice %58 {offsets = [2, 0, 0], sizes = [1, 8, 128], strides = [1, 1, 1]} : vector<4x8x128xf32> to vector<1x8x128xf32>
    %72 = vector.shape_cast %71 : vector<1x8x128xf32> to vector<8x128xf32>
    %73 = arith.addf %60, %72 : vector<8x128xf32>
    %74 = vector.extract_strided_slice %58 {offsets = [3, 0, 0], sizes = [1, 8, 128], strides = [1, 1, 1]} : vector<4x8x128xf32> to vector<1x8x128xf32>
    %75 = vector.shape_cast %74 : vector<1x8x128xf32> to vector<8x128xf32>
    %76 = arith.addf %62, %75 : vector<8x128xf32>
    %77 = vector.extract_strided_slice %15 {offsets = [0, 0, 0], sizes = [1, 8, 128], strides = [1, 1, 1]} : vector<8x8x128xf32> to vector<1x8x128xf32>
    %78 = vector.shape_cast %77 : vector<1x8x128xf32> to vector<8x128xf32>
    %79 = arith.subf %60, %78 : vector<8x128xf32>
    %80 = vector.extract_strided_slice %15 {offsets = [1, 0, 0], sizes = [1, 8, 128], strides = [1, 1, 1]} : vector<8x8x128xf32> to vector<1x8x128xf32>
    %81 = vector.shape_cast %80 : vector<1x8x128xf32> to vector<8x128xf32>
    %82 = arith.subf %62, %81 : vector<8x128xf32>
    %83 = vector.extract_strided_slice %15 {offsets = [2, 0, 0], sizes = [1, 8, 128], strides = [1, 1, 1]} : vector<8x8x128xf32> to vector<1x8x128xf32>
    %84 = vector.shape_cast %83 : vector<1x8x128xf32> to vector<8x128xf32>
    %85 = arith.addf %60, %84 : vector<8x128xf32>
    %86 = vector.extract_strided_slice %15 {offsets = [3, 0, 0], sizes = [1, 8, 128], strides = [1, 1, 1]} : vector<8x8x128xf32> to vector<1x8x128xf32>
    %87 = vector.shape_cast %86 : vector<1x8x128xf32> to vector<8x128xf32>
    %88 = arith.addf %62, %87 : vector<8x128xf32>
    %89 = arith.minimumf %73, %85 : vector<8x128xf32>
    %90 = arith.maximumf %67, %79 : vector<8x128xf32>
    %91 = arith.subf %89, %90 : vector<8x128xf32>
    %cst_23 = arith.constant 0.000000e+00 : f32
    %92 = vector.broadcast %cst_23 : f32 to vector<8x128xf32>
    %93 = arith.maximumf %91, %92 : vector<8x128xf32>
    %94 = arith.minimumf %76, %88 : vector<8x128xf32>
    %95 = arith.maximumf %70, %82 : vector<8x128xf32>
    %96 = arith.subf %94, %95 : vector<8x128xf32>
    %cst_24 = arith.constant 0.000000e+00 : f32
    %97 = vector.broadcast %cst_24 : f32 to vector<8x128xf32>
    %98 = arith.maximumf %96, %97 : vector<8x128xf32>
    %99 = arith.mulf %93, %98 : vector<8x128xf32>
    %100 = arith.subf %73, %67 : vector<8x128xf32>
    %cst_25 = arith.constant 0.000000e+00 : f32
    %101 = vector.broadcast %cst_25 : f32 to vector<8x128xf32>
    %102 = arith.maximumf %100, %101 : vector<8x128xf32>
    %103 = arith.subf %76, %70 : vector<8x128xf32>
    %cst_26 = arith.constant 0.000000e+00 : f32
    %104 = vector.broadcast %cst_26 : f32 to vector<8x128xf32>
    %105 = arith.maximumf %103, %104 : vector<8x128xf32>
    %106 = arith.mulf %102, %105 : vector<8x128xf32>
    %107 = arith.subf %85, %79 : vector<8x128xf32>
    %cst_27 = arith.constant 0.000000e+00 : f32
    %108 = vector.broadcast %cst_27 : f32 to vector<8x128xf32>
    %109 = arith.maximumf %107, %108 : vector<8x128xf32>
    %110 = arith.subf %88, %82 : vector<8x128xf32>
    %cst_28 = arith.constant 0.000000e+00 : f32
    %111 = vector.broadcast %cst_28 : f32 to vector<8x128xf32>
    %112 = arith.maximumf %110, %111 : vector<8x128xf32>
    %113 = arith.mulf %109, %112 : vector<8x128xf32>
    %114 = arith.addf %106, %113 : vector<8x128xf32>
    %115 = arith.subf %114, %99 : vector<8x128xf32>
    %cst_29 = arith.constant 9.99999974E-5 : f32
    %116 = vector.broadcast %cst_29 : f32 to vector<8x128xf32>
    %117 = arith.maximumf %115, %116 : vector<8x128xf32>
    %118 = arith.divf %99, %117 : vector<8x128xf32>
    %119 = arith.maximumf %73, %85 : vector<8x128xf32>
    %120 = arith.minimumf %67, %79 : vector<8x128xf32>
    %121 = arith.subf %119, %120 : vector<8x128xf32>
    %cst_30 = arith.constant 0.000000e+00 : f32
    %122 = vector.broadcast %cst_30 : f32 to vector<8x128xf32>
    %123 = arith.maximumf %121, %122 : vector<8x128xf32>
    %124 = arith.maximumf %76, %88 : vector<8x128xf32>
    %125 = arith.minimumf %70, %82 : vector<8x128xf32>
    %126 = arith.subf %124, %125 : vector<8x128xf32>
    %cst_31 = arith.constant 0.000000e+00 : f32
    %127 = vector.broadcast %cst_31 : f32 to vector<8x128xf32>
    %128 = arith.maximumf %126, %127 : vector<8x128xf32>
    %129 = arith.mulf %123, %128 : vector<8x128xf32>
    %cst_32 = arith.constant 9.99999974E-5 : f32
    %130 = vector.broadcast %cst_32 : f32 to vector<8x128xf32>
    %131 = arith.maximumf %129, %130 : vector<8x128xf32>
    %132 = arith.subf %131, %117 : vector<8x128xf32>
    %133 = arith.divf %132, %131 : vector<8x128xf32>
    %134 = arith.subf %118, %133 : vector<8x128xf32>
    %cst_33 = arith.constant 1.000000e+00 : f32
    %135 = vector.broadcast %cst_33 : f32 to vector<8x128xf32>
    %136 = arith.subf %135, %134 : vector<8x128xf32>
    %137 = arith.mulf %136, %64 : vector<8x128xf32>
    %138 = arith.mulf %137, %34 : vector<8x128xf32>
    %139 = math.log %14 : vector<8x128xf32>
    %140 = arith.mulf %64, %139 : vector<8x128xf32>
    %cst_34 = arith.constant 1.000000e+00 : f32
    %141 = vector.broadcast %cst_34 : f32 to vector<8x128xf32>
    %142 = arith.subf %141, %64 : vector<8x128xf32>
    %cst_35 = arith.constant 1.000000e+00 : f32
    %143 = vector.broadcast %cst_35 : f32 to vector<8x128xf32>
    %144 = arith.subf %143, %14 : vector<8x128xf32>
    %145 = math.log %144 : vector<8x128xf32>
    %146 = arith.mulf %142, %145 : vector<8x128xf32>
    %147 = arith.addf %140, %146 : vector<8x128xf32>
    %cst_36 = arith.constant 0.000000e+00 : f32
    %148 = vector.broadcast %cst_36 : f32 to vector<8x128xf32>
    %149 = arith.subf %148, %147 : vector<8x128xf32>
    %150 = arith.mulf %149, %34 : vector<8x128xf32>
    %c0_37 = arith.constant 0 : index
    %c0_38 = arith.constant 0 : index
    %151 = vector.load %arg6[%c0_37, %c0_38] : memref<32x128xf32, #tpu.memory_space<vmem>>, vector<32x128xf32>
    %152 = tpu.concatenate %57, %138, %150, %34 in 0 : vector<8x128xf32>, vector<8x128xf32>, vector<8x128xf32>, vector<8x128xf32> -> vector<32x128xf32>
    %153 = arith.addf %151, %152 : vector<32x128xf32>
    %c0_39 = arith.constant 0 : index
    %c0_40 = arith.constant 0 : index
    %154 = vector.load %arg6[%c0_39, %c0_40] : memref<32x128xf32, #tpu.memory_space<vmem>>, vector<32x128xf32>
    tpu.vector_store %arg6[%c0_39, %c0_40], %153 {strides = array<i32>} : memref<32x128xf32, #tpu.memory_space<vmem>>, vector<32x128xf32>,
    %c0_i32_41 = arith.constant 0 : i32
    %155 = arith.cmpi eq, %arg0, %c0_i32_41 : i32
    %156 = arith.extui %155 : i1 to i32
    %c0_i32_42 = arith.constant 0 : i32
    %157 = arith.cmpi ne, %156, %c0_i32_42 : i32
    scf.if %157 {
      %c0_43 = arith.constant 0 : index
      %c0_44 = arith.constant 0 : index
      %158 = vector.load %arg6[%c0_43, %c0_44] : memref<32x128xf32, #tpu.memory_space<vmem>>, vector<32x128xf32>
      %159 = vector.extract_strided_slice %158 {offsets = [0, 0], sizes = [8, 128], strides = [1, 1]} : vector<32x128xf32> to vector<8x128xf32>
      %160 = vector.shape_cast %159 : vector<8x128xf32> to vector<1x8x128xf32>
      %cst_45 = arith.constant dense<0.000000e+00> : vector<1xf32>
      %161 = vector.multi_reduction <add>, %160, %cst_45 [1, 2] : vector<1x8x128xf32> to vector<1xf32>
      %162 = vector.shape_cast %161 : vector<1xf32> to vector<1x1x1xf32>
      %163 = vector.extract %162[0, 0, 0] : f32 from vector<1x1x1xf32>
      %164 = vector.extract_strided_slice %158 {offsets = [8, 0], sizes = [8, 128], strides = [1, 1]} : vector<32x128xf32> to vector<8x128xf32>
      %165 = vector.shape_cast %164 : vector<8x128xf32> to vector<1x8x128xf32>
      %cst_46 = arith.constant dense<0.000000e+00> : vector<1xf32>
      %166 = vector.multi_reduction <add>, %165, %cst_46 [1, 2] : vector<1x8x128xf32> to vector<1xf32>
      %167 = vector.shape_cast %166 : vector<1xf32> to vector<1x1x1xf32>
      %168 = vector.extract %167[0, 0, 0] : f32 from vector<1x1x1xf32>
      %169 = vector.extract_strided_slice %158 {offsets = [16, 0], sizes = [8, 128], strides = [1, 1]} : vector<32x128xf32> to vector<8x128xf32>
      %170 = vector.shape_cast %169 : vector<8x128xf32> to vector<1x8x128xf32>
      %cst_47 = arith.constant dense<0.000000e+00> : vector<1xf32>
      %171 = vector.multi_reduction <add>, %170, %cst_47 [1, 2] : vector<1x8x128xf32> to vector<1xf32>
      %172 = vector.shape_cast %171 : vector<1xf32> to vector<1x1x1xf32>
      %173 = vector.extract %172[0, 0, 0] : f32 from vector<1x1x1xf32>
      %174 = vector.extract_strided_slice %158 {offsets = [24, 0], sizes = [8, 128], strides = [1, 1]} : vector<32x128xf32> to vector<8x128xf32>
      %175 = vector.shape_cast %174 : vector<8x128xf32> to vector<1x8x128xf32>
      %cst_48 = arith.constant dense<0.000000e+00> : vector<1xf32>
      %176 = vector.multi_reduction <add>, %175, %cst_48 [1, 2] : vector<1x8x128xf32> to vector<1xf32>
      %177 = vector.shape_cast %176 : vector<1xf32> to vector<1x1x1xf32>
      %178 = vector.extract %177[0, 0, 0] : f32 from vector<1x1x1xf32>
      %cst_49 = arith.constant 1.000000e+00 : f32
      %179 = arith.maximumf %178, %cst_49 : f32
      %cst_50 = arith.constant 1.000000e+00 : f32
      %180 = arith.divf %cst_50, %179 : f32
      %cst_51 = arith.constant 0.000000e+00 : f32
      %181 = arith.cmpf ogt, %178, %cst_51 : f32
      %182 = arith.extui %181 : i1 to i32
      %183 = arith.sitofp %182 : i32 to f32
      %cst_52 = arith.constant 1.000000e+00 : f32
      %184 = arith.mulf %cst_52, %163 : f32
      %185 = arith.mulf %184, %180 : f32
      %186 = arith.mulf %185, %183 : f32
      %c0_53 = arith.constant 0 : index
      %187 = memref.load %arg5[%c0_53] : memref<3xf32, #tpu.memory_space<smem>>
      memref.store %186, %arg5[%c0_53] : memref<3xf32, #tpu.memory_space<smem>>
      %cst_54 = arith.constant 1.000000e+00 : f32
      %188 = arith.mulf %cst_54, %168 : f32
      %189 = arith.mulf %188, %180 : f32
      %190 = arith.mulf %189, %183 : f32
      %c1 = arith.constant 1 : index
      %191 = memref.load %arg5[%c1] : memref<3xf32, #tpu.memory_space<smem>>
      memref.store %190, %arg5[%c1] : memref<3xf32, #tpu.memory_space<smem>>
      %cst_55 = arith.constant 1.000000e+00 : f32
      %192 = arith.mulf %cst_55, %173 : f32
      %193 = arith.mulf %192, %180 : f32
      %194 = arith.mulf %193, %183 : f32
      %c2 = arith.constant 2 : index
      %195 = memref.load %arg5[%c2] : memref<3xf32, #tpu.memory_space<smem>>
      memref.store %194, %arg5[%c2] : memref<3xf32, #tpu.memory_space<smem>>
    } else {
    }
    return
  }
  func.func @transform_0(%arg0: i32) -> (i32, i32, i32) {
    %c0_i32 = arith.constant 0 : i32
    %c0_i32_0 = arith.constant 0 : i32
    %c0_i32_1 = arith.constant 0 : i32
    return %c0_i32, %c0_i32_0, %arg0 : i32, i32, i32
  }
  func.func @transform_1(%arg0: i32) -> (i32, i32, i32) {
    %c0_i32 = arith.constant 0 : i32
    %c0_i32_0 = arith.constant 0 : i32
    %c0_i32_1 = arith.constant 0 : i32
    return %c0_i32, %c0_i32_0, %arg0 : i32, i32, i32
  }
  func.func @transform_2(%arg0: i32) -> (i32, i32, i32) {
    %c0_i32 = arith.constant 0 : i32
    %c0_i32_0 = arith.constant 0 : i32
    %c0_i32_1 = arith.constant 0 : i32
    return %c0_i32, %c0_i32_0, %arg0 : i32, i32, i32
  }
  func.func @transform_3(%arg0: i32) -> (i32, i32, i32) {
    %c0_i32 = arith.constant 0 : i32
    %c0_i32_0 = arith.constant 0 : i32
    %c0_i32_1 = arith.constant 0 : i32
    return %c0_i32, %c0_i32_0, %arg0 : i32, i32, i32
  }
  func.func @transform_4(%arg0: i32) -> i32 {
    %c0_i32 = arith.constant 0 : i32
    %c0_i32_0 = arith.constant 0 : i32
    return %c0_i32 : i32
  }
}

</mosaic_0001>

<llo_original>
// kernel: tpu_custom_call.1
$region0: #{tpu_custom_call.1}
  #allocation0 [shape = 'u32[]', space=smem, size = 0x4, offset = 0x4, fixed_abs, tag = 'smem constant byte address 0x4 - core index']
  #allocation1 [shape = 'u32[144,128]{1,0:T(1,128)}', space=vmem, size = 0x12000, scoped, tag = 'internal scratch']
  #allocation2 [shape = 'f32[32,128]{1,0:T(8,128)}', space=vmem, size = 0x4000, scoped, tag = 'scratch operand']
  %s0 = inlined_call_operand.hbm [shape: f32[4,8,128], index: 0, kind: input, shape index: {}]
  %s1 = inlined_call_operand.hbm [shape: f32[4,8,128], index: 1, kind: input, shape index: {}]
  %s2 = inlined_call_operand.hbm [shape: f32[1,8,128], index: 2, kind: input, shape index: {}]
  %s3 = inlined_call_operand.hbm [shape: f32[8,8,128], index: 3, kind: input, shape index: {}]
  %s4 = inlined_call_operand.hbm [shape: f32[3], index: 4, kind: output, shape index: {}]
  %s5 = sld [smem:[#allocation0]]
  $region50: #{tpu_custom_call.1} parent=0
    _
  %s7 = ssub.s32 1, %s5
  %s8 = scalar_select 0, %s7, %s5
  $region1: #{tpu_custom_call.1} parent=0
    #allocation3 [shape = 'u8[16384]{0}', space=vmem, size = 0x4000, scoped, tag = 'input window, operand 0, single buffered']
    #allocation4 [shape = 's32[1]{0}', space=sflag, size = 0x4, scoped, tag = 'scoped memory for tpu_custom_call.1']
    #allocation5 [shape = 's32[1]{0}', space=sflag, size = 0x4, scoped, tag = 'scoped memory for tpu_custom_call.1']
    #allocation6 [shape = 'u8[16384]{0}', space=vmem, size = 0x4000, scoped, tag = 'input window, operand 1, single buffered']
    #allocation7 [shape = 's32[1]{0}', space=sflag, size = 0x4, scoped, tag = 'scoped memory for tpu_custom_call.1']
    #allocation8 [shape = 'u8[4096]{0}', space=vmem, size = 0x1000, scoped, tag = 'input window, operand 2, single buffered']
    #allocation9 [shape = 'u8[32768]{0}', space=vmem, size = 0x8000, scoped, tag = 'input window, operand 3, single buffered']
    #allocation10 [shape = 's32[1]{0}', space=sflag, size = 0x4, scoped, tag = 'scoped memory for tpu_custom_call.1']
    #allocation11 [shape = 'u8[512]{0}', space=smem, size = 0x200, scoped, tag = 'output window, operand 0, single buffered']
    %9 = vsyncpa [#allocation4], 0
    %10 = vsyncpa [#allocation7], 0
    %11 = vsyncpa [#allocation10], 0
    %12 = vsyncpa [#allocation5], 0
    // Predicated region
    $region2: #{tpu_custom_call.1} parent=1 // pred_check
      _
    $region3: #{tpu_custom_call.1} parent=1 // pred_check_branch
      %14 = sbr.rel (0) target = $region5
    $region4: #{tpu_custom_call.1} parent=1 // pred_region
      %s16 = ssub.s32 512, 512
      %17 = vsyncadd [#allocation4], %s16
      %s18 = sshll.u32 [#allocation3], 4
      %s19 = int_to_ptr.vmem [resolvable:$true] %s18
      %24 = dma.hbm_to_vmem [thread:$0]  %s0, 512, %s19, [#allocation4], 128, 128, 8
    $region5: #{tpu_custom_call.1} parent=1 // pred_fallthru
      _
    // Predicated region
    $region6: #{tpu_custom_call.1} parent=1 // pred_check
      _
    $region7: #{tpu_custom_call.1} parent=1 // pred_check_branch
      %26 = sbr.rel (0) target = $region9
    $region8: #{tpu_custom_call.1} parent=1 // pred_region
      %s28 = ssub.s32 512, 512
      %29 = vsyncadd [#allocation7], %s28
      %s30 = sshll.u32 [#allocation6], 4
      %s31 = int_to_ptr.vmem [resolvable:$true] %s30
      %36 = dma.hbm_to_vmem [thread:$0]  %s1, 512, %s31, [#allocation7], 128, 128, 8
    $region9: #{tpu_custom_call.1} parent=1 // pred_fallthru
      _
    // Predicated region
    $region10: #{tpu_custom_call.1} parent=1 // pred_check
      _
    $region11: #{tpu_custom_call.1} parent=1 // pred_check_branch
      %38 = sbr.rel (0) target = $region13
    $region12: #{tpu_custom_call.1} parent=1 // pred_region
      %s40 = ssub.s32 128, 128
      %41 = vsyncadd [#allocation7], %s40
      %s43 = sshll.u32 [#allocation8], 4
      %s44 = int_to_ptr.vmem [resolvable:$true] %s43
      %46 = dma.hbm_to_vmem [thread:$0]  %s2, 128, %s44, [#allocation7]
    $region13: #{tpu_custom_call.1} parent=1 // pred_fallthru
      _
    // Predicated region
    $region14: #{tpu_custom_call.1} parent=1 // pred_check
      _
    $region15: #{tpu_custom_call.1} parent=1 // pred_check_branch
      %48 = sbr.rel (0) target = $region17
    $region16: #{tpu_custom_call.1} parent=1 // pred_region
      %s50 = ssub.s32 1024, 1024
      %51 = vsyncadd [#allocation10], %s50
      %s52 = sshll.u32 [#allocation9], 4
      %s53 = int_to_ptr.vmem [resolvable:$true] %s52
      %58 = dma.hbm_to_vmem [thread:$0]  %s3, 1024, %s53, [#allocation10], 128, 128, 8
    $region17: #{tpu_custom_call.1} parent=1 // pred_fallthru
      _
    // Predicated region
    $region18: #{tpu_custom_call.1} parent=1 // pred_check
      _
    $region19: #{tpu_custom_call.1} parent=1 // pred_check_branch
      %60 = sbr.rel (0) target = $region21
    $region20: #{tpu_custom_call.1} parent=1 // pred_region
      %61 = dma.done [#allocation4], 512
    $region21: #{tpu_custom_call.1} parent=1 // pred_fallthru
      _
    // Predicated region
    $region22: #{tpu_custom_call.1} parent=1 // pred_check
      _
    $region23: #{tpu_custom_call.1} parent=1 // pred_check_branch
      %63 = sbr.rel (0) target = $region25
    $region24: #{tpu_custom_call.1} parent=1 // pred_region
      %64 = dma.done [#allocation7], 512
    $region25: #{tpu_custom_call.1} parent=1 // pred_fallthru
      _
    // Predicated region
    $region26: #{tpu_custom_call.1} parent=1 // pred_check
      _
    $region27: #{tpu_custom_call.1} parent=1 // pred_check_branch
      %66 = sbr.rel (0) target = $region29
    $region28: #{tpu_custom_call.1} parent=1 // pred_region
      %67 = dma.done [#allocation7], 128
    $region29: #{tpu_custom_call.1} parent=1 // pred_fallthru
      _
    // Predicated region
    $region30: #{tpu_custom_call.1} parent=1 // pred_check
      _
    $region31: #{tpu_custom_call.1} parent=1 // pred_check_branch
      %69 = sbr.rel (0) target = $region33
    $region32: #{tpu_custom_call.1} parent=1 // pred_region
      %70 = dma.done [#allocation10], 1024
    $region33: #{tpu_custom_call.1} parent=1 // pred_fallthru
      _
    %p71 = scmp.eq.s32.totalorder 0, 0
    // Predicated region
    $region34: #{tpu_custom_call.1} parent=1 // pred_check
      %p72 = pneg %p71
    $region35: #{tpu_custom_call.1} parent=1 // pred_check_branch
      %74 = sbr.rel (%p72) target = $region37
    $region36: #{tpu_custom_call.1} parent=1 // pred_region
      %75 = vst [vmem:[#allocation2] sm:$0xff] 0.0
      %76 = vst [vmem:[#allocation2 + $0x8] sm:$0xff] 0.0
      %77 = vst [vmem:[#allocation2 + $0x10] sm:$0xff] 0.0
      %78 = vst [vmem:[#allocation2 + $0x18] sm:$0xff] 0.0
    $region37: #{tpu_custom_call.1} parent=1 // pred_fallthru
      _
    %v79 = vld [vmem:[#allocation3] sm:$0xff]
    %v80 = vld [vmem:[#allocation3 + $0x8] sm:$0xff]
    %v81 = vld [vmem:[#allocation3 + $0x10] sm:$0xff]
    %v82 = vld [vmem:[#allocation3 + $0x18] sm:$0xff]
    %v83 = vmax.f32 %v79, 0.0001
    %v84 = vmax.f32 %v80, 0.0001
    %v85 = vmax.f32 %v81, 0.0001
    %v86 = vmax.f32 %v82, 0.0001
    %v87 = vmin.f32 %v83, 0.9999
    %v88 = vmin.f32 %v84, 0.9999
    %v89 = vmin.f32 %v85, 0.9999
    %v90 = vmin.f32 %v86, 0.9999
    %v91 = vld [vmem:[#allocation6] sm:$0xff]
    %v92 = vld [vmem:[#allocation6 + $0x8] sm:$0xff]
    %v93 = vld [vmem:[#allocation6 + $0x10] sm:$0xff]
    %v94 = vld [vmem:[#allocation6 + $0x18] sm:$0xff]
    %v95 = vld [vmem:[#allocation8] sm:$0xff]
    %v96 = vmax.f32 %v95, 0.0001
    %v97 = vmin.f32 %v96, 0.9999
    %v98 = vld [vmem:[#allocation9] sm:$0xff]
    %v99 = vld [vmem:[#allocation9 + $0x8] sm:$0xff]
    %v100 = vld [vmem:[#allocation9 + $0x10] sm:$0xff]
    %v101 = vld [vmem:[#allocation9 + $0x18] sm:$0xff]
    %v102 = vld [vmem:[#allocation9 + $0x20] sm:$0xff]
    %v103 = vld [vmem:[#allocation9 + $0x28] sm:$0xff]
    %v104 = vld [vmem:[#allocation9 + $0x30] sm:$0xff]
    %v105 = vld [vmem:[#allocation9 + $0x38] sm:$0xff]
    %v106 = vlaneseq
    %v107 = vshrl.u32 %v106, 7
    %v108 = vlaneseq
    %v109 = vand.u32 %v108, 127
    %v110 = vmul.u32 %v107, 128
    %s111 = smul.u32 0, 128
    %v112 = vstv %s111
    %v113 = vadd.s32 %v110, %v112
    %v114 = vadd.s32 %v113, %v109
    %vm115 = vcmp.lt.s32.totalorder %v114, 682
    %v116 = vsel %vm115, 1, 0
    %v117 = vcvt.s32.f32 %v116
    %vm118 = vcmp.gt.f32.partialorder %v102, 0.0
    %v119 = vsel %vm118, 1, 0
    %v120 = vcvt.s32.f32 %v119
    %v121 = vmul.f32 %v120, %v117
    %v122 = vcvt.f32.s32.to.zero.pseudo %v102
    %vm123 = vcmp.eq.s32.totalorder %v122, 1
    %vm124 = vcmp.eq.s32.totalorder %v122, 2
    %vm125 = vcmp.eq.s32.totalorder %v122, 3
    %vm126 = vcmp.eq.s32.totalorder %v122, 4
    %v127 = vsel %vm123, 0.25, 0.75
    %v128 = vsel %vm124, 0.25, 0.75
    %v129 = vsel %vm125, 0.25, 0.75
    %v130 = vsel %vm126, 0.25, 0.75
    %v131 = vsub.f32 1.0, %v87
    %v132 = vsub.f32 1.0, %v88
    %v133 = vsub.f32 1.0, %v89
    %v134 = vsub.f32 1.0, %v90
    %v135 = vsel %vm123, %v87, %v131
    %v136 = vsel %vm124, %v88, %v132
    %v137 = vsel %vm125, %v89, %v133
    %v138 = vsel %vm126, %v90, %v134
    %v139 = vsub.f32 1.0, %v135
    %v140 = vsub.f32 1.0, %v136
    %v141 = vsub.f32 1.0, %v137
    %v142 = vsub.f32 1.0, %v138
    %v143 = vmul.f32 %v139, %v139
    %v144 = vmul.f32 %v140, %v140
    %v145 = vmul.f32 %v141, %v141
    %v146 = vmul.f32 %v142, %v142
    %v147 = vmul.f32 %v127, %v143
    %v148 = vmul.f32 %v128, %v144
    %v149 = vmul.f32 %v129, %v145
    %v150 = vmul.f32 %v130, %v146
    %v151 = vlog2.pop %v135
    %v152 = vmul.f32 %v151, 0.6931472
    %v153 = vlog2.pop %v136
    %v154 = vmul.f32 %v153, 0.6931472
    %v155 = vlog2.pop %v137
    %v156 = vmul.f32 %v155, 0.6931472
    %v157 = vlog2.pop %v138
    %v158 = vmul.f32 %v157, 0.6931472
    %v159 = vsub.f32 0.0, %v152
    %v160 = vsub.f32 0.0, %v154
    %v161 = vsub.f32 0.0, %v156
    %v162 = vsub.f32 0.0, %v158
    %v163 = vmul.f32 %v147, %v159
    %v164 = vmul.f32 %v148, %v160
    %v165 = vmul.f32 %v149, %v161
    %v166 = vmul.f32 %v150, %v162
    %v167 = vadd.f32 %v163, %v164
    %v168 = vadd.f32 %v167, %v165
    %v169 = vadd.f32 %v168, %v166
    %v170 = vmul.f32 %v169, %v117
    %v171 = vmul.f32 %v91, 1.442695
    %v172 = vpow.pop %v171
    %v173 = vmul.f32 %v92, 1.442695
    %v174 = vpow.pop %v173
    %v175 = vmul.f32 %v93, 1.442695
    %v176 = vpow.pop %v175
    %v177 = vmul.f32 %v94, 1.442695
    %v178 = vpow.pop %v177
    %v179 = vsub.f32 %v104, %v172
    %v180 = vsub.f32 %v105, %v174
    %v181 = vadd.f32 %v104, %v176
    %v182 = vadd.f32 %v105, %v178
    %v183 = vsub.f32 %v104, %v98
    %v184 = vsub.f32 %v105, %v99
    %v185 = vadd.f32 %v104, %v100
    %v186 = vadd.f32 %v105, %v101
    %v187 = vmin.f32 %v181, %v185
    %v188 = vmax.f32 %v179, %v183
    %v189 = vsub.f32 %v187, %v188
    %v190 = vmax.f32 %v189, 0.0
    %v191 = vmin.f32 %v182, %v186
    %v192 = vmax.f32 %v180, %v184
    %v193 = vsub.f32 %v191, %v192
    %v194 = vmax.f32 %v193, 0.0
    %v195 = vmul.f32 %v190, %v194
    %v196 = vsub.f32 %v181, %v179
    %v197 = vmax.f32 %v196, 0.0
    %v198 = vsub.f32 %v182, %v180
    %v199 = vmax.f32 %v198, 0.0
    %v200 = vmul.f32 %v197, %v199
    %v201 = vsub.f32 %v185, %v183
    %v202 = vmax.f32 %v201, 0.0
    %v203 = vsub.f32 %v186, %v184
    %v204 = vmax.f32 %v203, 0.0
    %v205 = vmul.f32 %v202, %v204
    %v206 = vadd.f32 %v200, %v205
    %v207 = vsub.f32 %v206, %v195
    %v208 = vmax.f32 %v207, 0.0001
    %v209 = vrcp.pop %v208
    %v210 = vmul.f32 %v195, %v209
    %v211 = vmax.f32 %v181, %v185
    %v212 = vmin.f32 %v179, %v183
    %v213 = vsub.f32 %v211, %v212
    %v214 = vmax.f32 %v213, 0.0
    %v215 = vmax.f32 %v182, %v186
    %v216 = vmin.f32 %v180, %v184
    %v217 = vsub.f32 %v215, %v216
    %v218 = vmax.f32 %v217, 0.0
    %v219 = vmul.f32 %v214, %v218
    %v220 = vmax.f32 %v219, 0.0001
    %v221 = vsub.f32 %v220, %v208
    %v222 = vrcp.pop %v220
    %v223 = vmul.f32 %v221, %v222
    %v224 = vsub.f32 %v210, %v223
    %v225 = vsub.f32 1.0, %v224
    %v226 = vmul.f32 %v225, %v103
    %v227 = vmul.f32 %v226, %v121
    %v228 = vlog2.pop %v97
    %v229 = vmul.f32 %v228, 0.6931472
    %v230 = vmul.f32 %v103, %v229
    %v231 = vsub.f32 1.0, %v103
    %v232 = vsub.f32 1.0, %v97
    %v233 = vlog2.pop %v232
    %v234 = vmul.f32 %v233, 0.6931472
    %v235 = vmul.f32 %v231, %v234
    %v236 = vadd.f32 %v230, %v235
    %v237 = vsub.f32 0.0, %v236
    %v238 = vmul.f32 %v237, %v121
    %v239 = vld [vmem:[#allocation2] sm:$0xff]
    %v240 = vld [vmem:[#allocation2 + $0x8] sm:$0xff]
    %v241 = vld [vmem:[#allocation2 + $0x10] sm:$0xff]
    %v242 = vld [vmem:[#allocation2 + $0x18] sm:$0xff]
    %v243 = vadd.f32 %v239, %v170
    %v244 = vadd.f32 %v240, %v227
    %v245 = vadd.f32 %v241, %v238
    %v246 = vadd.f32 %v242, %v121
    %247 = vst [vmem:[#allocation2] sm:$0xff] %v243
    %248 = vst [vmem:[#allocation2 + $0x8] sm:$0xff] %v244
    %249 = vst [vmem:[#allocation2 + $0x10] sm:$0xff] %v245
    %250 = vst [vmem:[#allocation2 + $0x18] sm:$0xff] %v246
    // Predicated region
    $region38: #{tpu_custom_call.1} parent=1 // pred_check
      %p251 = pneg %p71
    $region39: #{tpu_custom_call.1} parent=1 // pred_check_branch
      %253 = sbr.rel (%p251) target = $region41
    $region40: #{tpu_custom_call.1} parent=1 // pred_region
      %v254 = vld [vmem:[#allocation2] sm:$0xff]
      %v255 = vld [vmem:[#allocation2 + $0x8] sm:$0xff]
      %v256 = vld [vmem:[#allocation2 + $0x10] sm:$0xff]
      %v257 = vld [vmem:[#allocation2 + $0x18] sm:$0xff]
      %258 = vadd.xlane.f32.xlu0 %v254
      %v259 = vpop.xlane.xlu0 %258
      %v260 = vrot.slane %v259, 4
      %v261 = vadd.f32 %v259, %v260
      %v262 = vrot.slane %v261, 2
      %v263 = vadd.f32 %v261, %v262
      %v264 = vrot.slane %v263, 1
      %v265 = vadd.f32 %v263, %v264
      %s266 = vtos %v265
      %267 = vadd.xlane.f32.xlu0 %v255
      %v268 = vpop.xlane.xlu0 %267
      %v269 = vrot.slane %v268, 4
      %v270 = vadd.f32 %v268, %v269
      %v271 = vrot.slane %v270, 2
      %v272 = vadd.f32 %v270, %v271
      %v273 = vrot.slane %v272, 1
      %v274 = vadd.f32 %v272, %v273
      %s275 = vtos %v274
      %276 = vadd.xlane.f32.xlu0 %v256
      %v277 = vpop.xlane.xlu0 %276
      %v278 = vrot.slane %v277, 4
      %v279 = vadd.f32 %v277, %v278
      %v280 = vrot.slane %v279, 2
      %v281 = vadd.f32 %v279, %v280
      %v282 = vrot.slane %v281, 1
      %v283 = vadd.f32 %v281, %v282
      %s284 = vtos %v283
      %285 = vadd.xlane.f32.xlu0 %v257
      %v286 = vpop.xlane.xlu0 %285
      %v287 = vrot.slane %v286, 4
      %v288 = vadd.f32 %v286, %v287
      %v289 = vrot.slane %v288, 2
      %v290 = vadd.f32 %v288, %v289
      %v291 = vrot.slane %v290, 1
      %v292 = vadd.f32 %v290, %v291
      %s293 = vtos %v292
      %s294 = smax.f32 %s293, 1.0
      %v295 = vstv %s294
      %v296 = vrcp.pop %v295
      %s297 = vtos %v296
      %p298 = scmp.gt.f32.partialorder %s293, 0.0
      %s299 = scalar_select %p298, 1, 0
      %s300 = scvt.s32.f32 %s299
      %s301 = smul.f32 %s266, %s297
      %s302 = smul.f32 %s301, %s300
      %s303 = scalar_lea.smem [#allocation11], 0
      %304 = sst [smem:[%s303]] %s302
      %s305 = smul.f32 %s275, %s297
      %s306 = smul.f32 %s305, %s300
      %s307 = scalar_lea.smem [#allocation11], 1
      %308 = sst [smem:[%s307]] %s306
      %s309 = smul.f32 %s284, %s297
      %s310 = smul.f32 %s309, %s300
      %s311 = scalar_lea.smem [#allocation11], 2
      %312 = sst [smem:[%s311]] %s310
    $region41: #{tpu_custom_call.1} parent=1 // pred_fallthru
      _
    // Predicated region
    $region42: #{tpu_custom_call.1} parent=1 // pred_check
      _
    $region43: #{tpu_custom_call.1} parent=1 // pred_check_branch
      %314 = sbr.rel (0) target = $region45
    $region44: #{tpu_custom_call.1} parent=1 // pred_region
      %s316 = ssub.s32 16, 16
      %317 = vsyncadd [#allocation5], %s316
      %320 = dma.smem_to_hbm [#allocation11], 16, %s4, [#allocation5]
    $region45: #{tpu_custom_call.1} parent=1 // pred_fallthru
      _
    // Predicated region
    $region46: #{tpu_custom_call.1} parent=1 // pred_check
      _
    $region47: #{tpu_custom_call.1} parent=1 // pred_check_branch
      %322 = sbr.rel (0) target = $region49
    $region48: #{tpu_custom_call.1} parent=1 // pred_region
      %323 = dma.done [#allocation5], 16
    $region49: #{tpu_custom_call.1} parent=1 // pred_fallthru
      _
    %324 = sfence
    %325 = vsyncpa [#allocation4], 1
    %326 = vsyncpa [#allocation7], 1
    %327 = vsyncpa [#allocation10], 1
    %328 = vsyncpa [#allocation5], 1

</llo_original>
